<compile_context>
chip_gen: v7x
topology: tpu7x:2x2x1
jax: 0.10.0
libtpu: 0.0.40
codegen_flags: <defaults>
</compile_context>

<pallas_src>
import functools

import jax
import jax.numpy as jnp
from jax.experimental import pallas as pl
from jax.experimental.pallas import tpu as pltpu

_VMEM_LIMIT_BYTES = 48 * 1024 * 1024   # < v7x 64 MiB physical, > v5e/v6e defaults
_MASK_SENTINEL = -1e30                  # must stay f32 (not representable in bf16)
_LEAKY_SLOPE = 0.01                     # F.leaky_relu default negative_slope


def _round_up(x, m):
    return (x + m - 1) // m * m


def _pick_tile(n_lane, dp, budget_bytes):
    """Budget-driven square tile T (= tm = tk) for the edge kernel.

    Modeled per-step VMEM (bytes):
      2 bufs x ( T*T*2 [bf16 d] + T*T*1 [i8 adj] + T*dp*2 [bf16 z]
                 + T*dp*4 [f32 z_i] + 2*T*4 [score vectors] )
      + 2*T*dp*4 (out bufs) + T*dp*4 + T*4 (acc / running-max scratch)
      + ~4*T*T*4 (f32 logits/leaky/e/p elementwise temporaries)
    Candidates are capped at 512: that already fills the 2x256 MXU rows on
    v6e/v7x and keeps the modeled footprint ~7 MiB, well inside v7x's 64 MiB.
    """
    for t in (512, 256, 128):
        t = min(t, n_lane)
        dyn = 2 * (t * t * 3 + t * dp * 6 + 2 * t * 4)
        dyn += 2 * t * dp * 4 + t * dp * 4 + t * 4
        dyn += 4 * t * t * 4
        if dyn <= budget_bytes:
            return t
    return min(128, n_lane)


# ---------------------------------------------------------------------------
# Pass 1: fused node projections (tiled over node rows).
#   y = h @ W_all, W_all = [W1^T | 0 ...] ++ [W2^T | W1^T a_src | W1^T a_dst]
#   -> z   = y[:, :dp]   (bf16, lane `dout` overwritten with 1.0: ones-lane)
#      z_i = y[:, dp:]   (f32, lanes dout/dout+1 carry s_src / s_dst scores)
# ---------------------------------------------------------------------------
def _proj_kernel(h_ref, w_ref, z_ref, zi_ref, *, ones_lane):
    dp = z_ref.shape[1]
    y = jnp.dot(h_ref[...], w_ref[...], preferred_element_type=jnp.float32)
    zpart = y[:, :dp]
    lane = jax.lax.broadcasted_iota(jnp.int32, zpart.shape, 1)
    # Ones-lane: lane `ones_lane` of z is 1.0 so the aggregation matmul in the
    # edge kernel also produces the softmax denominator (row-sum of p) for free.
    z_ref[...] = jnp.where(lane == ones_lane, jnp.float32(1.0),
                           zpart).astype(z_ref.dtype)
    zi_ref[...] = y[:, dp:]


# ---------------------------------------------------------------------------
# Pass 2: per (dst-tile, src-tile) edge attention with flash-style online
# softmax + bf16 MXU aggregation (f32 accumulate).
# ---------------------------------------------------------------------------
def _edge_kernel(scal_ref, d_ref, adj_ref, z_ref, zi_ref, sdst_ref, ssrc_ref,
                 out_ref, m_ref, acc_ref, *, dout):
    k = pl.program_id(1)

    @pl.when(k == 0)
    def _init():
        m_ref[...] = jnp.full_like(m_ref, jnp.float32(_MASK_SENTINEL))
        acc_ref[...] = jnp.zeros_like(acc_ref)

    c = scal_ref[0]                                   # fc0 weight * attn weight of t
    d = d_ref[...].astype(jnp.float32)                # bf16 -> f32 (math stays f32)
    mask = adj_ref[...].astype(jnp.float32) > 0.0     # int8 -> f32 -> mask

    # logits[j, i] = <z_j, a_dst> + <z_i, a_src> + (w0 * a_e) * d[j, i]
    logits = sdst_ref[...] + ssrc_ref[...] + c * d
    e = jnp.where(logits > 0, logits, jnp.float32(_LEAKY_SLOPE) * logits)
    e = jnp.where(mask, e, jnp.float32(_MASK_SENTINEL))

    # Online softmax over src chunks: running max + rescaled accumulator.
    m_prev = m_ref[...]
    m_new = jnp.maximum(m_prev, jnp.max(e, axis=1, keepdims=True))
    # No explicit zero-select on p: masked entries are exactly the f32 sentinel,
    # so exp underflows to 0 once any real logit has been seen for the row, and
    # anything accumulated while the row was still all-masked is wiped by the
    # exp(sentinel - real) == 0 rescale below.  Requires every real dst row to
    # have >= 1 in-neighbor (e.g. self-loops); padded rows are sliced away.
    p = jnp.exp(e - m_new)
    scale = jnp.exp(m_prev - m_new)
    acc_ref[...] = acc_ref[...] * scale + jnp.dot(
        p.astype(jnp.bfloat16), z_ref[...], preferred_element_type=jnp.float32)
    m_ref[...] = m_new

    @pl.when(k == pl.num_programs(1) - 1)
    def _finalize():
        acc = acc_ref[...]
        row_sum = acc[:, dout:dout + 1]        # softmax denom from z's ones-lane
        inv = pl.reciprocal(jnp.maximum(row_sum, jnp.float32(1e-30)), approx=True)
        out_ref[...] = jnp.maximum(zi_ref[...] + acc * inv, jnp.float32(0.0))


def gat_layer(h, d, adj, params, *, tile=None, vmem_budget_bytes=36 * 1024 * 1024):
    n, din = h.shape
    dout = params["w1"].shape[0]
    f32, bf16 = jnp.float32, jnp.bfloat16

    # dout + 2 spare lanes needed: z lane `dout` is the ones-lane, z_i lanes
    # dout / dout+1 carry the per-node attention scores.
    dp = _round_up(dout + 2, 128)
    din_p = _round_up(din, 128)
    n_lane = _round_up(n, 128)
    t = tile if tile is not None else _pick_tile(n_lane, dp, vmem_budget_bytes)
    t = min(t, n_lane)
    n_pad = _round_up(n, t)
    grid_n = n_pad // t

    w1t = params["w1"].T.astype(f32)                  # (din, dout)
    w2t = params["w2"].T.astype(f32)
    a = params["attn"].astype(f32)[0]                 # (2*dout + 1,)
    a_src, a_dst, a_e = a[:dout], a[dout:2 * dout], a[2 * dout]

    # Fused projection weights: ONE MXU matmul yields z, z_i and both score
    # vectors (score matvecs re-associated as h @ (W1^T a)).
    w_all = jnp.zeros((din_p, 2 * dp), f32)
    w_all = w_all.at[:din, :dout].set(w1t)                        # -> z
    w_all = w_all.at[:din, dp:dp + dout].set(w2t)                 # -> z_i
    w_all = w_all.at[:din, dp + dout].set(w1t @ a_src)            # -> s_src
    w_all = w_all.at[:din, dp + dout + 1].set(w1t @ a_dst)        # -> s_dst

    h_p = jnp.zeros((n_pad, din_p), f32).at[:n, :din].set(h.astype(f32))

    # d / adj are streamed as bf16 / int8 (3 B/edge instead of 8) -- the edge
    # kernel is HBM-bound, so this is the main lever.  The cast is fused into
    # the pad, and the pad copy is skipped entirely when n is tile-aligned.
    # NOTE: in GMEL these are constant per graph; callers should hoist/reuse
    # the prepared arrays across training steps (here they run once per call).
    if n == n_pad:
        d_p = d.astype(bf16)
        adj_p = (adj > 0).astype(jnp.int8)
    else:
        d_p = jnp.zeros((n_pad, n_pad), bf16).at[:n, :n].set(d.astype(bf16))
        adj_p = (jnp.zeros((n_pad, n_pad), jnp.int8)
                 .at[:n, :n].set((adj > 0).astype(jnp.int8)))

    # --- pass 1: fused node projections --------------------------------------
    z, z_i = pl.pallas_call(
        functools.partial(_proj_kernel, ones_lane=dout),
        out_shape=(jax.ShapeDtypeStruct((n_pad, dp), bf16),     # z (MXU rhs)
                   jax.ShapeDtypeStruct((n_pad, dp), f32)),     # z_i + scores
        grid=(grid_n,),
        in_specs=[pl.BlockSpec((t, din_p), lambda i: (i, 0)),
                  # constant-index block -> single-buffered to save VMEM
                  pl.BlockSpec((din_p, 2 * dp), lambda i: (0, 0),
                               pipeline_mode=pl.Buffered(1))],
        out_specs=(pl.BlockSpec((t, dp), lambda i: (i, 0)),
                   pl.BlockSpec((t, dp), lambda i: (i, 0))),
        compiler_params=pltpu.CompilerParams(
            dimension_semantics=("parallel",),
            vmem_limit_bytes=_VMEM_LIMIT_BYTES),
    )(h_p, w_all)

    # Layout plumbing only (tiny): per-src scores lane-major, per-dst scores as
    # a column.  No (n_pad, 128) score slab, no large inter-kernel transpose.
    s_src_row = z_i[:, dout].reshape(1, n_pad)
    s_dst_col = z_i[:, dout + 1].reshape(n_pad, 1)

    # fc0's 1x1 weight and the edge-slot attention weight fold into one scalar.
    scalars = jnp.reshape(params["w0"][0, 0] * a_e, (1,)).astype(f32)

    # --- pass 2: edge attention + online softmax + aggregation ---------------
    out = pl.pallas_call(
        functools.partial(_edge_kernel, dout=dout),
        out_shape=jax.ShapeDtypeStruct((n_pad, dp), f32),
        grid=(grid_n, grid_n),
        in_specs=[pl.BlockSpec(memory_space=pltpu.MemorySpace.SMEM),  # scalar c
                  pl.BlockSpec((t, t), lambda i, k: (i, k)),     # d   (bf16)
                  pl.BlockSpec((t, t), lambda i, k: (i, k)),     # adj (int8)
                  pl.BlockSpec((t, dp), lambda i, k: (k, 0)),    # z   (bf16)
                  pl.BlockSpec((t, dp), lambda i, k: (i, 0)),    # z_i (f32)
                  pl.BlockSpec((t, 1), lambda i, k: (i, 0)),     # s_dst col
                  pl.BlockSpec((1, t), lambda i, k: (0, k))],    # s_src row
        out_specs=pl.BlockSpec((t, dp), lambda i, k: (i, 0)),
        scratch_shapes=[pltpu.VMEM((t, 1), f32),    # running max
                        pltpu.VMEM((t, dp), f32)],  # rescaled acc (+ row-sum lane)
        compiler_params=pltpu.CompilerParams(
            dimension_semantics=("parallel", "arbitrary"),
            vmem_limit_bytes=_VMEM_LIMIT_BYTES),
    )(scalars, d_p, adj_p, z, z_i, s_dst_col, s_src_row)

    return out[:n, :dout]


# ---------------------------------------------------------------------------
# Pure-JAX reference + test harness.
# ---------------------------------------------------------------------------
def gat_layer_ref(h, d, adj, params):
    dout = params["w1"].shape[0]
    z = h @ params["w1"].T
    z_i = h @ params["w2"].T
    a = params["attn"][0]
    t = d * params["w0"][0, 0]
    logits = (z @ a[dout:2 * dout])[:, None] + (z @ a[:dout])[None, :] + a[2 * dout] * t
    e = jnp.where(logits > 0, logits, 0.01 * logits)
    e = jnp.where(adj > 0, e, -1e30)
    p = jnp.where(adj > 0, jnp.exp(e - e.max(axis=1, keepdims=True)), 0.0)
    alpha = p / p.sum(axis=1, keepdims=True)
    return jnp.maximum(z_i + alpha @ z, 0.0)


def _make_case(key, n, in_ndim, out_ndim):
    k0, k1, k2, k3, k4, kh, kd = jax.random.split(key, 7)
    params = {
        "w0": jax.random.normal(k0, (1, 1), jnp.float32) * 0.5,                              # fc0
        "w1": jax.random.normal(k1, (out_ndim, in_ndim), jnp.float32) / jnp.sqrt(in_ndim),   # fc1
        "w2": jax.random.normal(k2, (out_ndim, in_ndim), jnp.float32) / jnp.sqrt(in_ndim),   # fc2
        "attn": jax.random.normal(k3, (1, 2 * out_ndim + 1), jnp.float32) * 0.2,             # attn_fc
        # self.weights (2, 1) -> dead code in forward; kept only for parity.
        "lambda_w": jax.random.normal(k4, (2, 1), jnp.float32),
    }
    h = jax.random.normal(kh, (n, in_ndim), jnp.float32)
    d = jax.random.uniform(kd, (n, n), jnp.float32, 0.1, 2.0)
    idx = jnp.arange(n)
    adj = (((idx[None, :] + idx[:, None]) % 3) != 0).astype(jnp.float32)
    adj = jnp.maximum(adj, jnp.eye(n, dtype=jnp.float32))     # self-loops
    return h, d, adj, params


def _check(out, ref, name, atol=1e-2, rtol=1e-2):
    # Tolerance covers: bf16 d stream, bf16 MXU operands in the aggregation
    # (f32 accumulate), the EUP approximate reciprocal, and reduced-precision
    # f32 MXU passes; genuine logic bugs produce O(0.1..1) errors.
    assert out.shape == ref.shape, name
    assert out.dtype == jnp.float32, name
    ok = jnp.allclose(out, ref, atol=atol, rtol=rtol)
    if not bool(ok):
        err = float(jnp.max(jnp.abs(out - ref)))
        raise AssertionError(f"mismatch vs reference ({name}), max|err|={err}")


if __name__ == "__main__":
    key = jax.random.PRNGKey(0)
    k_a, k_b, k_c = jax.random.split(key, 3)

    # Case A: toy sizes from the module (single tile, padded to 128).
    h, d, adj, params = _make_case(k_a, n=16, in_ndim=8, out_ndim=16)
    out = jax.block_until_ready(gat_layer(h, d, adj, params))
    _check(out, gat_layer_ref(h, d, adj, params), "small")

    # Case B: ragged N (padded path), default tile (single grid step) and a
    # forced 3x3 grid exercising the online-softmax accumulation across src.
    h2, d2, adj2, params2 = _make_case(k_b, n=300, in_ndim=24, out_ndim=48)
    ref2 = gat_layer_ref(h2, d2, adj2, params2)
    out2 = jax.block_until_ready(gat_layer(h2, d2, adj2, params2))
    _check(out2, ref2, "padded, single tile")
    out2b = jax.block_until_ready(gat_layer(h2, d2, adj2, params2, tile=128))
    _check(out2b, ref2, "padded, 3x3 grid (online softmax)")

    # Case C: tile-aligned N (pad copy skipped entirely) with a 2x2 grid.
    h3, d3, adj3, params3 = _make_case(k_c, n=256, in_ndim=24, out_ndim=48)
    out3 = jax.block_until_ready(gat_layer(h3, d3, adj3, params3, tile=128))
    _check(out3, gat_layer_ref(h3, d3, adj3, params3), "aligned, 2x2 grid")

    print("KERNEL_OK")
</pallas_src>

<mosaic_0001>
module attributes {stable_mosaic.version = 11 : i64} {
  func.func @_proj_kernel(%arg0: i32, %arg1: memref<128x128xf32, #tpu.memory_space<vmem>>, %arg2: memref<128x256xf32, #tpu.memory_space<vmem>>, %arg3: memref<128x128xbf16, #tpu.memory_space<vmem>>, %arg4: memref<128x128xf32, #tpu.memory_space<vmem>>) attributes {dimension_semantics = [#tpu.dimension_semantics<parallel>], iteration_bounds = array<i64: 1>, scalar_prefetch = 0 : i64, scratch_operands = 0 : i64, tpu.core_type = #tpu.core_type<tc>, window_params = [{transform_indices = @transform_0, window_bounds = array<i64: 128, 128>}, {pipeline_mode = #tpu.pipeline_mode<synchronous>, transform_indices = @transform_1, window_bounds = array<i64: 128, 256>}, {transform_indices = @transform_2, window_bounds = array<i64: 128, 128>}, {transform_indices = @transform_3, window_bounds = array<i64: 128, 128>}]} {
    %c0 = arith.constant 0 : index
    %c0_0 = arith.constant 0 : index
    %0 = vector.load %arg1[%c0, %c0_0] : memref<128x128xf32, #tpu.memory_space<vmem>>, vector<128x128xf32>
    %c0_1 = arith.constant 0 : index
    %c0_2 = arith.constant 0 : index
    %1 = vector.load %arg2[%c0_1, %c0_2] : memref<128x256xf32, #tpu.memory_space<vmem>>, vector<128x256xf32>
    %cst = arith.constant dense<0.000000e+00> : vector<128x256xf32>
    %2 = tpu.matmul %0, %1, %cst {dimension_numbers = #tpu.dot_dimension_numbers<[1], [0], [0], [1], [0, 0, 1, 1], [], []>} : vector<128x128xf32>, vector<128x256xf32>, vector<128x256xf32> -> vector<128x256xf32>
    %3 = vector.extract_strided_slice %2 {offsets = [0, 0], sizes = [128, 128], strides = [1, 1]} : vector<128x256xf32> to vector<128x128xf32>
    %4 = tpu.iota {dimensions = array<i32: 1>} : vector<128x128xi32>
    %c16_i32 = arith.constant 16 : i32
    %5 = vector.broadcast %c16_i32 : i32 to vector<128x128xi32>
    %6 = arith.cmpi eq, %4, %5 : vector<128x128xi32>
    %cst_3 = arith.constant 1.000000e+00 : f32
    %7 = vector.broadcast %cst_3 : f32 to vector<128x128xf32>
    %8 = arith.select %6, %7, %3 : vector<128x128xi1>, vector<128x128xf32>
    %9 = arith.truncf %8 : vector<128x128xf32> to vector<128x128xbf16>
    %c0_4 = arith.constant 0 : index
    %c0_5 = arith.constant 0 : index
    %10 = vector.load %arg3[%c0_4, %c0_5] : memref<128x128xbf16, #tpu.memory_space<vmem>>, vector<128x128xbf16>
    tpu.vector_store %arg3[%c0_4, %c0_5], %9 {strides = array<i32>} : memref<128x128xbf16, #tpu.memory_space<vmem>>, vector<128x128xbf16>,
    %11 = vector.extract_strided_slice %2 {offsets = [0, 128], sizes = [128, 128], strides = [1, 1]} : vector<128x256xf32> to vector<128x128xf32>
    %c0_6 = arith.constant 0 : index
    %c0_7 = arith.constant 0 : index
    %12 = vector.load %arg4[%c0_6, %c0_7] : memref<128x128xf32, #tpu.memory_space<vmem>>, vector<128x128xf32>
    tpu.vector_store %arg4[%c0_6, %c0_7], %11 {strides = array<i32>} : memref<128x128xf32, #tpu.memory_space<vmem>>, vector<128x128xf32>,
    return
  }
  func.func @transform_0(%arg0: i32) -> (i32, i32) {
    %c0_i32 = arith.constant 0 : i32
    %c0_i32_0 = arith.constant 0 : i32
    return %arg0, %c0_i32 : i32, i32
  }
  func.func @transform_1(%arg0: i32) -> (i32, i32) {
    %c0_i32 = arith.constant 0 : i32
    %c0_i32_0 = arith.constant 0 : i32
    %c0_i32_1 = arith.constant 0 : i32
    return %c0_i32, %c0_i32_0 : i32, i32
  }
  func.func @transform_2(%arg0: i32) -> (i32, i32) {
    %c0_i32 = arith.constant 0 : i32
    %c0_i32_0 = arith.constant 0 : i32
    return %arg0, %c0_i32 : i32, i32
  }
  func.func @transform_3(%arg0: i32) -> (i32, i32) {
    %c0_i32 = arith.constant 0 : i32
    %c0_i32_0 = arith.constant 0 : i32
    return %arg0, %c0_i32 : i32, i32
  }
}

</mosaic_0001>

<llo_original>
// kernel: tpu_custom_call.1
$region0: #{tpu_custom_call.1}
  #allocation0 [shape = 'u32[]', space=smem, size = 0x4, offset = 0x4, fixed_abs, tag = 'smem constant byte address 0x4 - core index']
  #allocation1 [shape = 'u32[144,128]{1,0:T(1,128)}', space=vmem, size = 0x12000, scoped, tag = 'internal scratch']
  %s0 = inlined_call_operand.hbm [shape: f32[128,128], index: 0, kind: input, shape index: {}]
  %s1 = inlined_call_operand.hbm [shape: f32[128,256], index: 1, kind: input, shape index: {}]
  %s2 = inlined_call_operand.hbm [shape: bf16[128,128], index: 2, kind: output, shape index: {0}]
  %s3 = inlined_call_operand.hbm [shape: f32[128,128], index: 3, kind: output, shape index: {1}]
  %4 = xla_tuple %s2, %s3
  %s5 = sld [smem:[#allocation0]]
  $region34: #{tpu_custom_call.1} parent=0
    _
  %s7 = ssub.s32 1, %s5
  %s8 = scalar_select 0, %s7, %s5
  $region1: #{tpu_custom_call.1} parent=0
    #allocation2 [shape = 'u8[65536]{0}', space=vmem, size = 0x10000, scoped, tag = 'input window, operand 0, single buffered']
    #allocation3 [shape = 's32[1]{0}', space=sflag, size = 0x4, scoped, tag = 'scoped memory for tpu_custom_call.1']
    #allocation4 [shape = 's32[1]{0}', space=sflag, size = 0x4, scoped, tag = 'scoped memory for tpu_custom_call.1']
    #allocation5 [shape = 'u8[131072]{0}', space=vmem, size = 0x20000, scoped, tag = 'input window, operand 1, single buffered']
    #allocation6 [shape = 's32[1]{0}', space=sflag, size = 0x4, scoped, tag = 'scoped memory for tpu_custom_call.1']
    #allocation7 [shape = 'u8[32768]{0}', space=vmem, size = 0x8000, scoped, tag = 'output window, operand 0, single buffered']
    #allocation8 [shape = 'u8[65536]{0}', space=vmem, size = 0x10000, scoped, tag = 'output window, operand 1, single buffered']
    #allocation9 [shape = 's32[1]{0}', space=sflag, size = 0x4, scoped, tag = 'scoped memory for tpu_custom_call.1']
    %9 = vsyncpa [#allocation3], 0
    %10 = vsyncpa [#allocation6], 0
    %11 = vsyncpa [#allocation4], 0
    %12 = vsyncpa [#allocation9], 0
    // Predicated region
    $region2: #{tpu_custom_call.1} parent=1 // pred_check
      _
    $region3: #{tpu_custom_call.1} parent=1 // pred_check_branch
      %14 = sbr.rel (0) target = $region5
    $region4: #{tpu_custom_call.1} parent=1 // pred_region
      %s16 = ssub.s32 2048, 2048
      %17 = vsyncadd [#allocation3], %s16
      %s18 = sshll.u32 [#allocation2], 4
      %s19 = int_to_ptr.vmem [resolvable:$true] %s18
      %24 = dma.hbm_to_vmem [thread:$0]  %s0, 2048, %s19, [#allocation3], 128, 128, 8
    $region5: #{tpu_custom_call.1} parent=1 // pred_fallthru
      _
    // Predicated region
    $region6: #{tpu_custom_call.1} parent=1 // pred_check
      _
    $region7: #{tpu_custom_call.1} parent=1 // pred_check_branch
      %26 = sbr.rel (0) target = $region9
    $region8: #{tpu_custom_call.1} parent=1 // pred_region
      %s28 = ssub.s32 4096, 4096
      %29 = vsyncadd [#allocation6], %s28
      %s30 = sshll.u32 [#allocation5], 4
      %s31 = int_to_ptr.vmem [resolvable:$true] %s30
      %36 = dma.hbm_to_vmem [thread:$0]  %s1, 4096, %s31, [#allocation6], 256, 256, 16
    $region9: #{tpu_custom_call.1} parent=1 // pred_fallthru
      _
    // Predicated region
    $region10: #{tpu_custom_call.1} parent=1 // pred_check
      _
    $region11: #{tpu_custom_call.1} parent=1 // pred_check_branch
      %38 = sbr.rel (0) target = $region13
    $region12: #{tpu_custom_call.1} parent=1 // pred_region
      %39 = dma.done [#allocation3], 2048
    $region13: #{tpu_custom_call.1} parent=1 // pred_fallthru
      _
    // Predicated region
    $region14: #{tpu_custom_call.1} parent=1 // pred_check
      _
    $region15: #{tpu_custom_call.1} parent=1 // pred_check_branch
      %41 = sbr.rel (0) target = $region17
    $region16: #{tpu_custom_call.1} parent=1 // pred_region
      %42 = dma.done [#allocation6], 4096
    $region17: #{tpu_custom_call.1} parent=1 // pred_fallthru
      _
    %v43 = vld [vmem:[#allocation2] sm:$0xff]
    %v44 = vld [vmem:[#allocation2 + $0x8] sm:$0xff]
    %v45 = vld [vmem:[#allocation2 + $0x10] sm:$0xff]
    %v46 = vld [vmem:[#allocation2 + $0x18] sm:$0xff]
    %v47 = vld [vmem:[#allocation2 + $0x20] sm:$0xff]
    %v48 = vld [vmem:[#allocation2 + $0x28] sm:$0xff]
    %v49 = vld [vmem:[#allocation2 + $0x30] sm:$0xff]
    %v50 = vld [vmem:[#allocation2 + $0x38] sm:$0xff]
    %v51 = vld [vmem:[#allocation2 + $0x40] sm:$0xff]
    %v52 = vld [vmem:[#allocation2 + $0x48] sm:$0xff]
    %v53 = vld [vmem:[#allocation2 + $0x50] sm:$0xff]
    %v54 = vld [vmem:[#allocation2 + $0x58] sm:$0xff]
    %v55 = vld [vmem:[#allocation2 + $0x60] sm:$0xff]
    %v56 = vld [vmem:[#allocation2 + $0x68] sm:$0xff]
    %v57 = vld [vmem:[#allocation2 + $0x70] sm:$0xff]
    %v58 = vld [vmem:[#allocation2 + $0x78] sm:$0xff]
    %v59 = vld [vmem:[#allocation5] sm:$0xff]
    %v60 = vld [vmem:[#allocation5 + $0x8] sm:$0xff]
    %v61 = vld [vmem:[#allocation5 + $0x10] sm:$0xff]
    %v62 = vld [vmem:[#allocation5 + $0x18] sm:$0xff]
    %v63 = vld [vmem:[#allocation5 + $0x20] sm:$0xff]
    %v64 = vld [vmem:[#allocation5 + $0x28] sm:$0xff]
    %v65 = vld [vmem:[#allocation5 + $0x30] sm:$0xff]
    %v66 = vld [vmem:[#allocation5 + $0x38] sm:$0xff]
    %v67 = vld [vmem:[#allocation5 + $0x40] sm:$0xff]
    %v68 = vld [vmem:[#allocation5 + $0x48] sm:$0xff]
    %v69 = vld [vmem:[#allocation5 + $0x50] sm:$0xff]
    %v70 = vld [vmem:[#allocation5 + $0x58] sm:$0xff]
    %v71 = vld [vmem:[#allocation5 + $0x60] sm:$0xff]
    %v72 = vld [vmem:[#allocation5 + $0x68] sm:$0xff]
    %v73 = vld [vmem:[#allocation5 + $0x70] sm:$0xff]
    %v74 = vld [vmem:[#allocation5 + $0x78] sm:$0xff]
    %v75 = vld [vmem:[#allocation5 + $0x80] sm:$0xff]
    %v76 = vld [vmem:[#allocation5 + $0x88] sm:$0xff]
    %v77 = vld [vmem:[#allocation5 + $0x90] sm:$0xff]
    %v78 = vld [vmem:[#allocation5 + $0x98] sm:$0xff]
    %v79 = vld [vmem:[#allocation5 + $0xa0] sm:$0xff]
    %v80 = vld [vmem:[#allocation5 + $0xa8] sm:$0xff]
    %v81 = vld [vmem:[#allocation5 + $0xb0] sm:$0xff]
    %v82 = vld [vmem:[#allocation5 + $0xb8] sm:$0xff]
    %v83 = vld [vmem:[#allocation5 + $0xc0] sm:$0xff]
    %v84 = vld [vmem:[#allocation5 + $0xc8] sm:$0xff]
    %v85 = vld [vmem:[#allocation5 + $0xd0] sm:$0xff]
    %v86 = vld [vmem:[#allocation5 + $0xd8] sm:$0xff]
    %v87 = vld [vmem:[#allocation5 + $0xe0] sm:$0xff]
    %v88 = vld [vmem:[#allocation5 + $0xe8] sm:$0xff]
    %v89 = vld [vmem:[#allocation5 + $0xf0] sm:$0xff]
    %v90 = vld [vmem:[#allocation5 + $0xf8] sm:$0xff]
    %91 = vmatprep.subr.mxu0 %v60
    %92 = vmatpush1.msra.mxu0 %v59
    %93 = vmatprep.subr.mxu0 %v62
    %94 = vmatpush1.msra.mxu0 %v61
    %95 = vmatprep.subr.mxu0 %v64
    %96 = vmatpush1.msra.mxu0 %v63
    %97 = vmatprep.subr.mxu0 %v66
    %98 = vmatpush1.msra.mxu0 %v65
    %99 = vmatprep.subr.mxu0 %v68
    %100 = vmatpush1.msra.mxu0 %v67
    %101 = vmatprep.subr.mxu0 %v70
    %102 = vmatpush1.msra.mxu0 %v69
    %103 = vmatprep.subr.mxu0 %v72
    %104 = vmatpush1.msra.mxu0 %v71
    %105 = vmatprep.subr.mxu0 %v74
    %106 = vmatpush1.msra.mxu0 %v73
    %107 = vmatprep.subr.mxu0 %v76
    %108 = vmatpush1.msra.mxu0 %v75
    %109 = vmatprep.subr.mxu0 %v78
    %110 = vmatpush1.msra.mxu0 %v77
    %111 = vmatprep.subr.mxu0 %v80
    %112 = vmatpush1.msra.mxu0 %v79
    %113 = vmatprep.subr.mxu0 %v82
    %114 = vmatpush1.msra.mxu0 %v81
    %115 = vmatprep.subr.mxu0 %v84
    %116 = vmatpush1.msra.mxu0 %v83
    %117 = vmatprep.subr.mxu0 %v86
    %118 = vmatpush1.msra.mxu0 %v85
    %119 = vmatprep.subr.mxu0 %v88
    %120 = vmatpush1.msra.mxu0 %v87
    %121 = vmatprep.subr.mxu0 %v90
    %122 = vmatpush1.msra.mxu0 %v89
    %123 = vmatprep.subr.mxu0 0.0
    %124 = vmatpush1.msra.mxu0 0.0
    %125 = vmatprep.subr.mxu0 0.0
    %126 = vmatpush1.msra.mxu0 0.0
    %127 = vmatprep.subr.mxu0 0.0
    %128 = vmatpush1.msra.mxu0 0.0
    %129 = vmatprep.subr.mxu0 0.0
    %130 = vmatpush1.msra.mxu0 0.0
    %131 = vmatprep.subr.mxu0 0.0
    %132 = vmatpush1.msra.mxu0 0.0
    %133 = vmatprep.subr.mxu0 0.0
    %134 = vmatpush1.msra.mxu0 0.0
    %135 = vmatprep.subr.mxu0 0.0
    %136 = vmatpush1.msra.mxu0 0.0
    %137 = vmatprep.subr.mxu0 0.0
    %138 = vmatpush1.msra.mxu0 0.0
    %139 = vmatprep.subr.mxu0 0.0
    %140 = vmatpush1.msra.mxu0 0.0
    %141 = vmatprep.subr.mxu0 0.0
    %142 = vmatpush1.msra.mxu0 0.0
    %143 = vmatprep.subr.mxu0 0.0
    %144 = vmatpush1.msra.mxu0 0.0
    %145 = vmatprep.subr.mxu0 0.0
    %146 = vmatpush1.msra.mxu0 0.0
    %147 = vmatprep.subr.mxu0 0.0
    %148 = vmatpush1.msra.mxu0 0.0
    %149 = vmatprep.subr.mxu0 0.0
    %150 = vmatpush1.msra.mxu0 0.0
    %151 = vmatprep.subr.mxu0 0.0
    %152 = vmatpush1.msra.mxu0 0.0
    %153 = vmatprep.subr.mxu0 0.0
    %154 = vmatpush1.msra.mxu0 0.0
    %155 = vmatprep.mubr.f32.mxu0 0.0
    %156 = vmatmul.mubr.f32.gmra.mrb[0].mxu0 %v43
    %v157 = vpop.f32.mrb[0].mxu0
    %v158 = vadd.f32 0.0, %v157
    %v159 = vpop.f32.mrb[0].mxu0
    %v160 = vadd.f32 0.0, %v159
    %161 = vmatprep.mubr.f32.mxu0 0.0
    %162 = vmatmul.mubr.f32.gmra.mrb[0].mxu0 %v44
    %v163 = vpop.f32.mrb[0].mxu0
    %v164 = vadd.f32 0.0, %v163
    %v165 = vpop.f32.mrb[0].mxu0
    %v166 = vadd.f32 0.0, %v165
    %167 = vmatprep.mubr.f32.mxu0 0.0
    %168 = vmatmul.mubr.f32.gmra.mrb[0].mxu0 %v45
    %v169 = vpop.f32.mrb[0].mxu0
    %v170 = vadd.f32 0.0, %v169
    %v171 = vpop.f32.mrb[0].mxu0
    %v172 = vadd.f32 0.0, %v171
    %173 = vmatprep.mubr.f32.mxu0 0.0
    %174 = vmatmul.mubr.f32.gmra.mrb[0].mxu0 %v46
    %v175 = vpop.f32.mrb[0].mxu0
    %v176 = vadd.f32 0.0, %v175
    %v177 = vpop.f32.mrb[0].mxu0
    %v178 = vadd.f32 0.0, %v177
    %179 = vmatprep.mubr.f32.mxu0 0.0
    %180 = vmatmul.mubr.f32.gmra.mrb[0].mxu0 %v47
    %v181 = vpop.f32.mrb[0].mxu0
    %v182 = vadd.f32 0.0, %v181
    %v183 = vpop.f32.mrb[0].mxu0
    %v184 = vadd.f32 0.0, %v183
    %185 = vmatprep.mubr.f32.mxu0 0.0
    %186 = vmatmul.mubr.f32.gmra.mrb[0].mxu0 %v48
    %v187 = vpop.f32.mrb[0].mxu0
    %v188 = vadd.f32 0.0, %v187
    %v189 = vpop.f32.mrb[0].mxu0
    %v190 = vadd.f32 0.0, %v189
    %191 = vmatprep.mubr.f32.mxu0 0.0
    %192 = vmatmul.mubr.f32.gmra.mrb[0].mxu0 %v49
    %v193 = vpop.f32.mrb[0].mxu0
    %v194 = vadd.f32 0.0, %v193
    %v195 = vpop.f32.mrb[0].mxu0
    %v196 = vadd.f32 0.0, %v195
    %197 = vmatprep.mubr.f32.mxu0 0.0
    %198 = vmatmul.mubr.f32.gmra.mrb[0].mxu0 %v50
    %v199 = vpop.f32.mrb[0].mxu0
    %v200 = vadd.f32 0.0, %v199
    %v201 = vpop.f32.mrb[0].mxu0
    %v202 = vadd.f32 0.0, %v201
    %203 = vmatprep.mubr.f32.mxu0 0.0
    %204 = vmatmul.mubr.f32.gmra.mrb[0].mxu0 %v51
    %v205 = vpop.f32.mrb[0].mxu0
    %v206 = vadd.f32 0.0, %v205
    %v207 = vpop.f32.mrb[0].mxu0
    %v208 = vadd.f32 0.0, %v207
    %209 = vmatprep.mubr.f32.mxu0 0.0
    %210 = vmatmul.mubr.f32.gmra.mrb[0].mxu0 %v52
    %v211 = vpop.f32.mrb[0].mxu0
    %v212 = vadd.f32 0.0, %v211
    %v213 = vpop.f32.mrb[0].mxu0
    %v214 = vadd.f32 0.0, %v213
    %215 = vmatprep.mubr.f32.mxu0 0.0
    %216 = vmatmul.mubr.f32.gmra.mrb[0].mxu0 %v53
    %v217 = vpop.f32.mrb[0].mxu0
    %v218 = vadd.f32 0.0, %v217
    %v219 = vpop.f32.mrb[0].mxu0
    %v220 = vadd.f32 0.0, %v219
    %221 = vmatprep.mubr.f32.mxu0 0.0
    %222 = vmatmul.mubr.f32.gmra.mrb[0].mxu0 %v54
    %v223 = vpop.f32.mrb[0].mxu0
    %v224 = vadd.f32 0.0, %v223
    %v225 = vpop.f32.mrb[0].mxu0
    %v226 = vadd.f32 0.0, %v225
    %227 = vmatprep.mubr.f32.mxu0 0.0
    %228 = vmatmul.mubr.f32.gmra.mrb[0].mxu0 %v55
    %v229 = vpop.f32.mrb[0].mxu0
    %v230 = vadd.f32 0.0, %v229
    %v231 = vpop.f32.mrb[0].mxu0
    %v232 = vadd.f32 0.0, %v231
    %233 = vmatprep.mubr.f32.mxu0 0.0
    %234 = vmatmul.mubr.f32.gmra.mrb[0].mxu0 %v56
    %v235 = vpop.f32.mrb[0].mxu0
    %v236 = vadd.f32 0.0, %v235
    %v237 = vpop.f32.mrb[0].mxu0
    %v238 = vadd.f32 0.0, %v237
    %239 = vmatprep.mubr.f32.mxu0 0.0
    %240 = vmatmul.mubr.f32.gmra.mrb[0].mxu0 %v57
    %v241 = vpop.f32.mrb[0].mxu0
    %v242 = vadd.f32 0.0, %v241
    %v243 = vpop.f32.mrb[0].mxu0
    %v244 = vadd.f32 0.0, %v243
    %245 = vmatprep.mubr.f32.mxu0 0.0
    %246 = vmatmul.mubr.f32.gmra.mrb[0].mxu0 %v58
    %v247 = vpop.f32.mrb[0].mxu0
    %v248 = vadd.f32 0.0, %v247
    %v249 = vpop.f32.mrb[0].mxu0
    %v250 = vadd.f32 0.0, %v249
    %251 = vdwg.mxu0
    %v252 = vlaneseq
    %v253 = vand.u32 %v252, 127
    %vm254 = vcmp.eq.s32.totalorder %v253, 16
    %v255 = vsel %vm254, 1.0, %v158
    %v256 = vsel %vm254, 1.0, %v164
    %v257 = vsel %vm254, 1.0, %v170
    %v258 = vsel %vm254, 1.0, %v176
    %v259 = vsel %vm254, 1.0, %v182
    %v260 = vsel %vm254, 1.0, %v188
    %v261 = vsel %vm254, 1.0, %v194
    %v262 = vsel %vm254, 1.0, %v200
    %v263 = vsel %vm254, 1.0, %v206
    %v264 = vsel %vm254, 1.0, %v212
    %v265 = vsel %vm254, 1.0, %v218
    %v266 = vsel %vm254, 1.0, %v224
    %v267 = vsel %vm254, 1.0, %v230
    %v268 = vsel %vm254, 1.0, %v236
    %v269 = vsel %vm254, 1.0, %v242
    %v270 = vsel %vm254, 1.0, %v248
    %v271 = vpack.c.bf16 %v256, %v255
    %v272 = vpack.c.bf16 %v258, %v257
    %v273 = vpack.c.bf16 %v260, %v259
    %v274 = vpack.c.bf16 %v262, %v261
    %v275 = vpack.c.bf16 %v264, %v263
    %v276 = vpack.c.bf16 %v266, %v265
    %v277 = vpack.c.bf16 %v268, %v267
    %v278 = vpack.c.bf16 %v270, %v269
    %v287 = vunpack.c.l.b16 %v271
    %v288 = vunpack.c.h.b16 %v271
    %v289 = vunpack.c.l.b16 %v272
    %v290 = vunpack.c.h.b16 %v272
    %v291 = vunpack.c.l.b16 %v273
    %v292 = vunpack.c.h.b16 %v273
    %v293 = vunpack.c.l.b16 %v274
    %v294 = vunpack.c.h.b16 %v274
    %v295 = vunpack.c.l.b16 %v275
    %v296 = vunpack.c.h.b16 %v275
    %v297 = vunpack.c.l.b16 %v276
    %v298 = vunpack.c.h.b16 %v276
    %v299 = vunpack.c.l.b16 %v277
    %v300 = vunpack.c.h.b16 %v277
    %v301 = vunpack.c.l.b16 %v278
    %v302 = vunpack.c.h.b16 %v278
    %v303 = vpack.c.b16 %v287, %v287
    %v304 = vpack.c.b16 %v288, %v288
    %v305 = vpack.c.b16 %v289, %v289
    %v306 = vpack.c.b16 %v290, %v290
    %v307 = vpack.c.b16 %v291, %v291
    %v308 = vpack.c.b16 %v292, %v292
    %v309 = vpack.c.b16 %v293, %v293
    %v310 = vpack.c.b16 %v294, %v294
    %v311 = vpack.c.b16 %v295, %v295
    %v312 = vpack.c.b16 %v296, %v296
    %v313 = vpack.c.b16 %v297, %v297
    %v314 = vpack.c.b16 %v298, %v298
    %v315 = vpack.c.b16 %v299, %v299
    %v316 = vpack.c.b16 %v300, %v300
    %v317 = vpack.c.b16 %v301, %v301
    %v318 = vpack.c.b16 %v302, %v302
    %335 = vst [vmem:[#allocation7] sm:$0xf] %v303
    %336 = vst [vmem:[#allocation7 + $0x4] sm:$0xf] %v304
    %337 = vst [vmem:[#allocation7 + $0x8] sm:$0xf] %v305
    %338 = vst [vmem:[#allocation7 + $0xc] sm:$0xf] %v306
    %339 = vst [vmem:[#allocation7 + $0x10] sm:$0xf] %v307
    %340 = vst [vmem:[#allocation7 + $0x14] sm:$0xf] %v308
    %341 = vst [vmem:[#allocation7 + $0x18] sm:$0xf] %v309
    %342 = vst [vmem:[#allocation7 + $0x1c] sm:$0xf] %v310
    %343 = vst [vmem:[#allocation7 + $0x20] sm:$0xf] %v311
    %344 = vst [vmem:[#allocation7 + $0x24] sm:$0xf] %v312
    %345 = vst [vmem:[#allocation7 + $0x28] sm:$0xf] %v313
    %346 = vst [vmem:[#allocation7 + $0x2c] sm:$0xf] %v314
    %347 = vst [vmem:[#allocation7 + $0x30] sm:$0xf] %v315
    %348 = vst [vmem:[#allocation7 + $0x34] sm:$0xf] %v316
    %349 = vst [vmem:[#allocation7 + $0x38] sm:$0xf] %v317
    %350 = vst [vmem:[#allocation7 + $0x3c] sm:$0xf] %v318
    %351 = vst [vmem:[#allocation8] sm:$0xff] %v160
    %352 = vst [vmem:[#allocation8 + $0x8] sm:$0xff] %v166
    %353 = vst [vmem:[#allocation8 + $0x10] sm:$0xff] %v172
    %354 = vst [vmem:[#allocation8 + $0x18] sm:$0xff] %v178
    %355 = vst [vmem:[#allocation8 + $0x20] sm:$0xff] %v184
    %356 = vst [vmem:[#allocation8 + $0x28] sm:$0xff] %v190
    %357 = vst [vmem:[#allocation8 + $0x30] sm:$0xff] %v196
    %358 = vst [vmem:[#allocation8 + $0x38] sm:$0xff] %v202
    %359 = vst [vmem:[#allocation8 + $0x40] sm:$0xff] %v208
    %360 = vst [vmem:[#allocation8 + $0x48] sm:$0xff] %v214
    %361 = vst [vmem:[#allocation8 + $0x50] sm:$0xff] %v220
    %362 = vst [vmem:[#allocation8 + $0x58] sm:$0xff] %v226
    %363 = vst [vmem:[#allocation8 + $0x60] sm:$0xff] %v232
    %364 = vst [vmem:[#allocation8 + $0x68] sm:$0xff] %v238
    %365 = vst [vmem:[#allocation8 + $0x70] sm:$0xff] %v244
    %366 = vst [vmem:[#allocation8 + $0x78] sm:$0xff] %v250
    // Predicated region
    $region18: #{tpu_custom_call.1} parent=1 // pred_check
      _
    $region19: #{tpu_custom_call.1} parent=1 // pred_check_branch
      %368 = sbr.rel (0) target = $region21
    $region20: #{tpu_custom_call.1} parent=1 // pred_region
      %s370 = ssub.s32 1024, 1024
      %371 = vsyncadd [#allocation4], %s370
      %s372 = sshll.u32 [#allocation7], 4
      %s373 = int_to_ptr.vmem [resolvable:$true] %s372
      %378 = dma.vmem_to_hbm [thread:$0]  %s373, 1024, %s2, [#allocation4], 64, 64, 4
    $region21: #{tpu_custom_call.1} parent=1 // pred_fallthru
      _
    // Predicated region
    $region22: #{tpu_custom_call.1} parent=1 // pred_check
      _
    $region23: #{tpu_custom_call.1} parent=1 // pred_check_branch
      %380 = sbr.rel (0) target = $region25
    $region24: #{tpu_custom_call.1} parent=1 // pred_region
      %s382 = ssub.s32 2048, 2048
      %383 = vsyncadd [#allocation9], %s382
      %s384 = sshll.u32 [#allocation8], 4
      %s385 = int_to_ptr.vmem [resolvable:$true] %s384
      %390 = dma.vmem_to_hbm [thread:$0]  %s385, 2048, %s3, [#allocation9], 128, 128, 8
    $region25: #{tpu_custom_call.1} parent=1 // pred_fallthru
      _
    // Predicated region
    $region26: #{tpu_custom_call.1} parent=1 // pred_check
      _
    $region27: #{tpu_custom_call.1} parent=1 // pred_check_branch
      %392 = sbr.rel (0) target = $region29
    $region28: #{tpu_custom_call.1} parent=1 // pred_region
      %393 = dma.done [#allocation4], 1024
    $region29: #{tpu_custom_call.1} parent=1 // pred_fallthru
      _
    // Predicated region
    $region30: #{tpu_custom_call.1} parent=1 // pred_check
      _
    $region31: #{tpu_custom_call.1} parent=1 // pred_check_branch
      %395 = sbr.rel (0) target = $region33
    $region32: #{tpu_custom_call.1} parent=1 // pred_region
      %396 = dma.done [#allocation9], 2048
    $region33: #{tpu_custom_call.1} parent=1 // pred_fallthru
      _
    %397 = vsyncpa [#allocation3], 1
    %398 = vsyncpa [#allocation6], 1
    %399 = vsyncpa [#allocation4], 1
    %400 = vsyncpa [#allocation9], 1

</llo_original>
